<compile_context>
chip_gen: v7x
topology: tpu7x:2x2x1
jax: 0.10.0
libtpu: 0.0.40
codegen_flags: <defaults>
</compile_context>

<pallas_src>
import jax
import jax.numpy as jnp
from jax.experimental import pallas as pl
from jax.experimental.pallas import tpu as pltpu

INPUT_SIZE = 100
HIDDEN_SIZE = 64
MEMORY_SIZE = 32

# padded / fused dims
IN_P = 128                  # input 100 -> 128
HID2 = 2 * HIDDEN_SIZE      # 128 : [left hidden | right hidden]
ENC_P = 128                 # encoded: left 0:32, right 32:64, zero-weight pad 64:128
DEC_P = 2 * 128             # 256 : [left decoded (pad to 128) | right decoded (pad to 128)]
DEC_OUT_P = 128             # averaged decoded, lane-padded (slice to 100 outside)

# column offsets of each layer inside the fused weight / bias slabs
_OFF1 = 0
_OFF2 = _OFF1 + HID2        # 128
_OFF3 = _OFF2 + ENC_P       # 256
_OFF4 = _OFF3 + HID2        # 384
_SLAB_W = _OFF4 + DEC_P     # 640


def _fused_kernel(x_ref, w_ref, b_ref, enc_ref, dec_ref):
    x = x_ref[...]                              # (TB, 128)

    # Slice the resident weight/bias slabs directly on the Ref at 128-lane
    # boundaries: each slice is an aligned (128,128)/(128,256) tile load and we
    # never hold the full 320 KiB slab in vregs at once.
    w1 = w_ref[:, _OFF1:_OFF2]                  # (128, 128)  [lw1 | rw1], rows 100:128 zero
    w2 = w_ref[:, _OFF2:_OFF3]                  # (128, 128)  block-diag lw2 / rw2
    w3 = w_ref[:, _OFF3:_OFF4]                  # (128, 128)  block-diag lw3 / rw3, rows 64:128 zero
    w4 = w_ref[:, _OFF4:_SLAB_W]                # (128, 256)  block-diag lw4 / rw4 (each pad to 128 cols)
    b1 = b_ref[:, _OFF1:_OFF2]
    b2 = b_ref[:, _OFF2:_OFF3]
    b3 = b_ref[:, _OFF3:_OFF4]
    b4 = b_ref[:, _OFF4:_SLAB_W]

    # layer 1: both hemispheres in one 128-wide matmul
    h = jnp.maximum(jnp.dot(x, w1, preferred_element_type=jnp.float32) + b1, 0.0)
    # layer 2: e[:, :32] = left encoded, e[:, 32:64] = right encoded, e[:, 64:] = sigmoid(0) pad
    e = jax.nn.sigmoid(jnp.dot(h, w2, preferred_element_type=jnp.float32) + b2)
    # layer 3: padding lanes of e hit zero rows of w3, so they contribute nothing
    h2 = jnp.maximum(jnp.dot(e, w3, preferred_element_type=jnp.float32) + b3, 0.0)
    # layer 4: d[:, :100] = left decoded, d[:, 128:228] = right decoded
    d = jax.nn.sigmoid(jnp.dot(h2, w4, preferred_element_type=jnp.float32) + b4)

    # combined encoded: lane combine of the two 32-wide halves, emitted lane-dense (pad to 128)
    enc_avg = (e[:, :MEMORY_SIZE] + e[:, MEMORY_SIZE:2 * MEMORY_SIZE]) * 0.5
    enc_pad = jnp.zeros((enc_avg.shape[0], ENC_P - MEMORY_SIZE), jnp.float32)
    enc_ref[...] = jnp.concatenate([enc_avg, enc_pad], axis=-1)

    # combined decoded: add the two 128-wide halves (vreg-aligned slices, pure VPU)
    dec_ref[...] = (d[:, :DEC_OUT_P] + d[:, DEC_OUT_P:]) * 0.5


def _round_up(v, m):
    return (v + m - 1) // m * m


def _pack_params(left, right):
    """Fuse the two hemispheres into one (128, 640) weight slab + one (1, 640) bias slab."""
    f32 = jnp.float32
    W1 = jnp.zeros((IN_P, HID2), f32)
    W1 = W1.at[:INPUT_SIZE, :HIDDEN_SIZE].set(left["w1"])
    W1 = W1.at[:INPUT_SIZE, HIDDEN_SIZE:].set(right["w1"])

    W2 = jnp.zeros((HID2, ENC_P), f32)
    W2 = W2.at[:HIDDEN_SIZE, :MEMORY_SIZE].set(left["w2"])
    W2 = W2.at[HIDDEN_SIZE:, MEMORY_SIZE:2 * MEMORY_SIZE].set(right["w2"])

    W3 = jnp.zeros((ENC_P, HID2), f32)
    W3 = W3.at[:MEMORY_SIZE, :HIDDEN_SIZE].set(left["w3"])
    W3 = W3.at[MEMORY_SIZE:2 * MEMORY_SIZE, HIDDEN_SIZE:].set(right["w3"])

    W4 = jnp.zeros((HID2, DEC_P), f32)
    W4 = W4.at[:HIDDEN_SIZE, :INPUT_SIZE].set(left["w4"])
    W4 = W4.at[HIDDEN_SIZE:, DEC_OUT_P:DEC_OUT_P + INPUT_SIZE].set(right["w4"])

    w_slab = jnp.concatenate([W1, W2, W3, W4], axis=1)          # (128, 640)

    B1 = jnp.zeros((1, HID2), f32)
    B1 = B1.at[:, :HIDDEN_SIZE].set(left["b1"]).at[:, HIDDEN_SIZE:].set(right["b1"])
    B2 = jnp.zeros((1, ENC_P), f32)
    B2 = B2.at[:, :MEMORY_SIZE].set(left["b2"]).at[:, MEMORY_SIZE:2 * MEMORY_SIZE].set(right["b2"])
    B3 = jnp.zeros((1, HID2), f32)
    B3 = B3.at[:, :HIDDEN_SIZE].set(left["b3"]).at[:, HIDDEN_SIZE:].set(right["b3"])
    B4 = jnp.zeros((1, DEC_P), f32)
    B4 = B4.at[:, :INPUT_SIZE].set(left["b4"]).at[:, DEC_OUT_P:DEC_OUT_P + INPUT_SIZE].set(right["b4"])
    b_slab = jnp.concatenate([B1, B2, B3, B4], axis=1)          # (1, 640)

    return w_slab, b_slab


def lateralized_hippocampus_forward(x, left_params, right_params, *, batch_tile=256):
    """x: (B, INPUT_SIZE) f32. *_params: dict with w1,b1,w2,b2,w3,b3,w4,b4 ((in,out) weights)."""
    B = x.shape[0]
    w_slab, b_slab = _pack_params(left_params, right_params)

    # batch tiling: tile of up to `batch_tile` rows (multiple of 8), zero-pad the rest
    tb = min(batch_tile, _round_up(B, 8))
    b_pad = _round_up(B, tb)
    x_pad = jnp.zeros((b_pad, IN_P), jnp.float32)
    x_pad = x_pad.at[:B, :INPUT_SIZE].set(x.astype(jnp.float32))

    grid = (b_pad // tb,)

    # advisory cost hint for the XLA scheduler around the custom call
    flops = 2 * b_pad * IN_P * _SLAB_W
    transcendentals = b_pad * (ENC_P + DEC_P)       # sigmoid lanes
    bytes_accessed = 4 * (b_pad * IN_P + IN_P * _SLAB_W + _SLAB_W
                          + b_pad * (ENC_P + DEC_OUT_P))

    enc_p, dec_p = pl.pallas_call(
        _fused_kernel,
        out_shape=(
            jax.ShapeDtypeStruct((b_pad, ENC_P), jnp.float32),
            jax.ShapeDtypeStruct((b_pad, DEC_OUT_P), jnp.float32),
        ),
        grid=grid,
        in_specs=[
            pl.BlockSpec((tb, IN_P), lambda i: (i, 0)),          # x tile, pipelined over batch
            pl.BlockSpec((IN_P, _SLAB_W), lambda i: (0, 0)),     # fused weights, resident
            pl.BlockSpec((1, _SLAB_W), lambda i: (0, 0)),        # fused biases, resident
        ],
        out_specs=(
            pl.BlockSpec((tb, ENC_P), lambda i: (i, 0)),
            pl.BlockSpec((tb, DEC_OUT_P), lambda i: (i, 0)),
        ),
        compiler_params=pltpu.CompilerParams(
            dimension_semantics=("parallel",),
        ),
        cost_estimate=pl.CostEstimate(
            flops=flops, transcendentals=transcendentals, bytes_accessed=bytes_accessed),
    )(x_pad, w_slab, b_slab)

    enc = enc_p[:B, :MEMORY_SIZE]
    dec = dec_p[:B, :INPUT_SIZE]
    return enc, dec


def _make_hemisphere_params(key):
    """Deterministic synthetic params; weights stored as (in, out), biases as (1, out)."""
    ks = jax.random.split(key, 8)

    def w(k, fan_in, fan_out):
        bound = 1.0 / jnp.sqrt(fan_in)
        return jax.random.uniform(k, (fan_in, fan_out), jnp.float32, -bound, bound)

    def b(k, fan_in, fan_out):
        bound = 1.0 / jnp.sqrt(fan_in)
        return jax.random.uniform(k, (1, fan_out), jnp.float32, -bound, bound)

    return {
        "w1": w(ks[0], INPUT_SIZE, HIDDEN_SIZE), "b1": b(ks[1], INPUT_SIZE, HIDDEN_SIZE),
        "w2": w(ks[2], HIDDEN_SIZE, MEMORY_SIZE), "b2": b(ks[3], HIDDEN_SIZE, MEMORY_SIZE),
        "w3": w(ks[4], MEMORY_SIZE, HIDDEN_SIZE), "b3": b(ks[5], MEMORY_SIZE, HIDDEN_SIZE),
        "w4": w(ks[6], HIDDEN_SIZE, INPUT_SIZE), "b4": b(ks[7], HIDDEN_SIZE, INPUT_SIZE),
    }


def _reference_forward(x, left_params, right_params):
    def hemi(p):
        h = jnp.maximum(x @ p["w1"] + p["b1"], 0.0)
        e = jax.nn.sigmoid(h @ p["w2"] + p["b2"])
        h2 = jnp.maximum(e @ p["w3"] + p["b3"], 0.0)
        d = jax.nn.sigmoid(h2 @ p["w4"] + p["b4"])
        return e, d

    le, ld = hemi(left_params)
    re, rd = hemi(right_params)
    return (le + re) / 2.0, (ld + rd) / 2.0


if __name__ == "__main__":
    key = jax.random.PRNGKey(0)
    k_x, k_left, k_right = jax.random.split(key, 3)

    batch = 8
    x = jax.random.normal(k_x, (batch, INPUT_SIZE), jnp.float32)
    left_params = _make_hemisphere_params(k_left)
    right_params = _make_hemisphere_params(k_right)

    fwd = jax.jit(lateralized_hippocampus_forward)
    enc, dec = fwd(x, left_params, right_params)
    jax.block_until_ready((enc, dec))

    enc_ref, dec_ref = _reference_forward(x, left_params, right_params)
    assert enc.shape == (batch, MEMORY_SIZE)
    assert dec.shape == (batch, INPUT_SIZE)
    assert jnp.allclose(enc, enc_ref, atol=1e-5, rtol=1e-5)
    assert jnp.allclose(dec, dec_ref, atol=1e-5, rtol=1e-5)

    print("KERNEL_OK")
</pallas_src>

<mosaic_0001>
module attributes {stable_mosaic.version = 11 : i64} {
  func.func @_fused_kernel(%arg0: i32, %arg1: memref<8x128xf32, #tpu.memory_space<vmem>>, %arg2: memref<128x640xf32, #tpu.memory_space<vmem>>, %arg3: memref<1x640xf32, #tpu.memory_space<vmem>>, %arg4: memref<8x128xf32, #tpu.memory_space<vmem>>, %arg5: memref<8x128xf32, #tpu.memory_space<vmem>>) attributes {dimension_semantics = [#tpu.dimension_semantics<parallel>], iteration_bounds = array<i64: 1>, scalar_prefetch = 0 : i64, scratch_operands = 0 : i64, tpu.core_type = #tpu.core_type<tc>, window_params = [{transform_indices = @transform_0, window_bounds = array<i64: 8, 128>}, {pipeline_mode = #tpu.pipeline_mode<synchronous>, transform_indices = @transform_1, window_bounds = array<i64: 128, 640>}, {pipeline_mode = #tpu.pipeline_mode<synchronous>, transform_indices = @transform_2, window_bounds = array<i64: 1, 640>}, {transform_indices = @transform_3, window_bounds = array<i64: 8, 128>}, {transform_indices = @transform_4, window_bounds = array<i64: 8, 128>}]} {
    %c0 = arith.constant 0 : index
    %c0_0 = arith.constant 0 : index
    %0 = vector.load %arg1[%c0, %c0_0] : memref<8x128xf32, #tpu.memory_space<vmem>>, vector<8x128xf32>
    %c0_1 = arith.constant 0 : index
    %c0_2 = arith.constant 0 : index
    %1 = vector.load %arg2[%c0_1, %c0_2] : memref<128x640xf32, #tpu.memory_space<vmem>>, vector<128x128xf32>
    %c0_3 = arith.constant 0 : index
    %c128 = arith.constant 128 : index
    %2 = vector.load %arg2[%c0_3, %c128] : memref<128x640xf32, #tpu.memory_space<vmem>>, vector<128x128xf32>
    %c0_4 = arith.constant 0 : index
    %c256 = arith.constant 256 : index
    %3 = vector.load %arg2[%c0_4, %c256] : memref<128x640xf32, #tpu.memory_space<vmem>>, vector<128x128xf32>
    %c0_5 = arith.constant 0 : index
    %c384 = arith.constant 384 : index
    %4 = vector.load %arg2[%c0_5, %c384] : memref<128x640xf32, #tpu.memory_space<vmem>>, vector<128x256xf32>
    %c0_6 = arith.constant 0 : index
    %c0_7 = arith.constant 0 : index
    %5 = vector.load %arg3[%c0_6, %c0_7] : memref<1x640xf32, #tpu.memory_space<vmem>>, vector<1x128xf32>
    %c0_8 = arith.constant 0 : index
    %c128_9 = arith.constant 128 : index
    %6 = vector.load %arg3[%c0_8, %c128_9] : memref<1x640xf32, #tpu.memory_space<vmem>>, vector<1x128xf32>
    %c0_10 = arith.constant 0 : index
    %c256_11 = arith.constant 256 : index
    %7 = vector.load %arg3[%c0_10, %c256_11] : memref<1x640xf32, #tpu.memory_space<vmem>>, vector<1x128xf32>
    %c0_12 = arith.constant 0 : index
    %c384_13 = arith.constant 384 : index
    %8 = vector.load %arg3[%c0_12, %c384_13] : memref<1x640xf32, #tpu.memory_space<vmem>>, vector<1x256xf32>
    %cst = arith.constant dense<0.000000e+00> : vector<8x128xf32>
    %9 = tpu.matmul %0, %1, %cst {dimension_numbers = #tpu.dot_dimension_numbers<[1], [0], [0], [1], [0, 0, 1, 1], [], []>} : vector<8x128xf32>, vector<128x128xf32>, vector<8x128xf32> -> vector<8x128xf32>
    %10 = vector.broadcast %5 : vector<1x128xf32> to vector<8x128xf32>
    %11 = arith.addf %9, %10 : vector<8x128xf32>
    %cst_14 = arith.constant 0.000000e+00 : f32
    %12 = vector.broadcast %cst_14 : f32 to vector<8x128xf32>
    %13 = arith.maximumf %11, %12 : vector<8x128xf32>
    %cst_15 = arith.constant dense<0.000000e+00> : vector<8x128xf32>
    %14 = tpu.matmul %13, %2, %cst_15 {dimension_numbers = #tpu.dot_dimension_numbers<[1], [0], [0], [1], [0, 0, 1, 1], [], []>} : vector<8x128xf32>, vector<128x128xf32>, vector<8x128xf32> -> vector<8x128xf32>
    %15 = vector.broadcast %6 : vector<1x128xf32> to vector<8x128xf32>
    %16 = arith.addf %14, %15 : vector<8x128xf32>
    %17 = arith.negf %16 : vector<8x128xf32>
    %18 = math.exp %17 : vector<8x128xf32>
    %cst_16 = arith.constant 1.000000e+00 : f32
    %19 = vector.broadcast %cst_16 : f32 to vector<8x128xf32>
    %20 = arith.addf %19, %18 : vector<8x128xf32>
    %21 = arith.divf %19, %20 : vector<8x128xf32>
    %cst_17 = arith.constant dense<0.000000e+00> : vector<8x128xf32>
    %22 = tpu.matmul %21, %3, %cst_17 {dimension_numbers = #tpu.dot_dimension_numbers<[1], [0], [0], [1], [0, 0, 1, 1], [], []>} : vector<8x128xf32>, vector<128x128xf32>, vector<8x128xf32> -> vector<8x128xf32>
    %23 = vector.broadcast %7 : vector<1x128xf32> to vector<8x128xf32>
    %24 = arith.addf %22, %23 : vector<8x128xf32>
    %cst_18 = arith.constant 0.000000e+00 : f32
    %25 = vector.broadcast %cst_18 : f32 to vector<8x128xf32>
    %26 = arith.maximumf %24, %25 : vector<8x128xf32>
    %cst_19 = arith.constant dense<0.000000e+00> : vector<8x256xf32>
    %27 = tpu.matmul %26, %4, %cst_19 {dimension_numbers = #tpu.dot_dimension_numbers<[1], [0], [0], [1], [0, 0, 1, 1], [], []>} : vector<8x128xf32>, vector<128x256xf32>, vector<8x256xf32> -> vector<8x256xf32>
    %28 = vector.broadcast %8 : vector<1x256xf32> to vector<8x256xf32>
    %29 = arith.addf %27, %28 : vector<8x256xf32>
    %30 = arith.negf %29 : vector<8x256xf32>
    %31 = math.exp %30 : vector<8x256xf32>
    %cst_20 = arith.constant 1.000000e+00 : f32
    %32 = vector.broadcast %cst_20 : f32 to vector<8x256xf32>
    %33 = arith.addf %32, %31 : vector<8x256xf32>
    %34 = arith.divf %32, %33 : vector<8x256xf32>
    %35 = vector.extract_strided_slice %21 {offsets = [0, 0], sizes = [8, 32], strides = [1, 1]} : vector<8x128xf32> to vector<8x32xf32>
    %36 = vector.extract_strided_slice %21 {offsets = [0, 32], sizes = [8, 32], strides = [1, 1]} : vector<8x128xf32> to vector<8x32xf32>
    %37 = arith.addf %35, %36 : vector<8x32xf32>
    %cst_21 = arith.constant 5.000000e-01 : f32
    %38 = vector.broadcast %cst_21 : f32 to vector<8x32xf32>
    %39 = arith.mulf %37, %38 : vector<8x32xf32>
    %cst_22 = arith.constant 0.000000e+00 : f32
    %40 = vector.broadcast %cst_22 : f32 to vector<8x96xf32>
    %41 = tpu.concatenate %39, %40 in 1 : vector<8x32xf32>, vector<8x96xf32> -> vector<8x128xf32>
    %c0_23 = arith.constant 0 : index
    %c0_24 = arith.constant 0 : index
    %42 = vector.load %arg4[%c0_23, %c0_24] : memref<8x128xf32, #tpu.memory_space<vmem>>, vector<8x128xf32>
    tpu.vector_store %arg4[%c0_23, %c0_24], %41 {strides = array<i32>} : memref<8x128xf32, #tpu.memory_space<vmem>>, vector<8x128xf32>,
    %43 = vector.extract_strided_slice %34 {offsets = [0, 0], sizes = [8, 128], strides = [1, 1]} : vector<8x256xf32> to vector<8x128xf32>
    %44 = vector.extract_strided_slice %34 {offsets = [0, 128], sizes = [8, 128], strides = [1, 1]} : vector<8x256xf32> to vector<8x128xf32>
    %45 = arith.addf %43, %44 : vector<8x128xf32>
    %cst_25 = arith.constant 5.000000e-01 : f32
    %46 = vector.broadcast %cst_25 : f32 to vector<8x128xf32>
    %47 = arith.mulf %45, %46 : vector<8x128xf32>
    %c0_26 = arith.constant 0 : index
    %c0_27 = arith.constant 0 : index
    %48 = vector.load %arg5[%c0_26, %c0_27] : memref<8x128xf32, #tpu.memory_space<vmem>>, vector<8x128xf32>
    tpu.vector_store %arg5[%c0_26, %c0_27], %47 {strides = array<i32>} : memref<8x128xf32, #tpu.memory_space<vmem>>, vector<8x128xf32>,
    return
  }
  func.func @transform_0(%arg0: i32) -> (i32, i32) {
    %c0_i32 = arith.constant 0 : i32
    %c0_i32_0 = arith.constant 0 : i32
    return %arg0, %c0_i32 : i32, i32
  }
  func.func @transform_1(%arg0: i32) -> (i32, i32) {
    %c0_i32 = arith.constant 0 : i32
    %c0_i32_0 = arith.constant 0 : i32
    %c0_i32_1 = arith.constant 0 : i32
    return %c0_i32, %c0_i32_0 : i32, i32
  }
  func.func @transform_2(%arg0: i32) -> (i32, i32) {
    %c0_i32 = arith.constant 0 : i32
    %c0_i32_0 = arith.constant 0 : i32
    %c0_i32_1 = arith.constant 0 : i32
    return %c0_i32, %c0_i32_0 : i32, i32
  }
  func.func @transform_3(%arg0: i32) -> (i32, i32) {
    %c0_i32 = arith.constant 0 : i32
    %c0_i32_0 = arith.constant 0 : i32
    return %arg0, %c0_i32 : i32, i32
  }
  func.func @transform_4(%arg0: i32) -> (i32, i32) {
    %c0_i32 = arith.constant 0 : i32
    %c0_i32_0 = arith.constant 0 : i32
    return %arg0, %c0_i32 : i32, i32
  }
}

</mosaic_0001>

<llo_original>
// kernel: lateralized_hippocampus_forward.1
$region0: #{lateralized_hippocampus_forward.1}
  #allocation0 [shape = 'u32[]', space=smem, size = 0x4, offset = 0x4, fixed_abs, tag = 'smem constant byte address 0x4 - core index']
  #allocation1 [shape = 'u32[144,128]{1,0:T(1,128)}', space=vmem, size = 0x12000, scoped, tag = 'internal scratch']
  %s0 = inlined_call_operand.vmem [shape: f32[8,128], index: 0, kind: input, shape index: {}]
  %s1 = inlined_call_operand.vmem [shape: f32[128,640], index: 1, kind: input, shape index: {}]
  %s2 = inlined_call_operand.vmem [shape: f32[1,640], index: 2, kind: input, shape index: {}]
  %s3 = inlined_call_operand.hbm [shape: f32[8,128], index: 3, kind: output, shape index: {0}]
  %s4 = inlined_call_operand.hbm [shape: f32[8,128], index: 4, kind: output, shape index: {1}]
  %5 = xla_tuple %s3, %s4
  %s6 = sld [smem:[#allocation0]]
  $region30: #{lateralized_hippocampus_forward.1} parent=0
    _
  %s8 = ssub.s32 1, %s6
  %s9 = scalar_select 0, %s8, %s6
  $region1: #{lateralized_hippocampus_forward.1} parent=0
    #allocation2 [shape = 'u8[4096]{0}', space=vmem, size = 0x1000, scoped, tag = 'output window, operand 0, single buffered']
    #allocation3 [shape = 's32[1]{0}', space=sflag, size = 0x4, scoped, tag = 'scoped memory for lateralized_hippocampus_forward.1']
    #allocation4 [shape = 'u8[4096]{0}', space=vmem, size = 0x1000, scoped, tag = 'output window, operand 1, single buffered']
    #allocation5 [shape = 's32[1]{0}', space=sflag, size = 0x4, scoped, tag = 'scoped memory for lateralized_hippocampus_forward.1']
    %10 = vsyncpa [#allocation3], 0
    %11 = vsyncpa [#allocation5], 0
    // Predicated region
    $region2: #{lateralized_hippocampus_forward.1} parent=1 // pred_check
      _
    $region3: #{lateralized_hippocampus_forward.1} parent=1 // pred_check_branch
      %13 = sbr.rel (0) target = $region5
    $region4: #{lateralized_hippocampus_forward.1} parent=1 // pred_region
      _
    $region5: #{lateralized_hippocampus_forward.1} parent=1 // pred_fallthru
      _
    // Predicated region
    $region6: #{lateralized_hippocampus_forward.1} parent=1 // pred_check
      _
    $region7: #{lateralized_hippocampus_forward.1} parent=1 // pred_check_branch
      %15 = sbr.rel (0) target = $region9
    $region8: #{lateralized_hippocampus_forward.1} parent=1 // pred_region
      _
    $region9: #{lateralized_hippocampus_forward.1} parent=1 // pred_fallthru
      _
    // Predicated region
    $region10: #{lateralized_hippocampus_forward.1} parent=1 // pred_check
      _
    $region11: #{lateralized_hippocampus_forward.1} parent=1 // pred_check_branch
      %17 = sbr.rel (0) target = $region13
    $region12: #{lateralized_hippocampus_forward.1} parent=1 // pred_region
      _
    $region13: #{lateralized_hippocampus_forward.1} parent=1 // pred_fallthru
      _
    %v18 = vld [vmem:[%s0] sm:$0xff]
    %v19 = vld [vmem:[%s1] sm:$0xff]
    %v20 = vld [vmem:[%s1 + $0x28] sm:$0xff]
    %v21 = vld [vmem:[%s1 + $0x50] sm:$0xff]
    %v22 = vld [vmem:[%s1 + $0x78] sm:$0xff]
    %v23 = vld [vmem:[%s1 + $0xa0] sm:$0xff]
    %v24 = vld [vmem:[%s1 + $0xc8] sm:$0xff]
    %v25 = vld [vmem:[%s1 + $0xf0] sm:$0xff]
    %v26 = vld [vmem:[%s1 + $0x118] sm:$0xff]
    %v27 = vld [vmem:[%s1 + $0x140] sm:$0xff]
    %v28 = vld [vmem:[%s1 + $0x168] sm:$0xff]
    %v29 = vld [vmem:[%s1 + $0x190] sm:$0xff]
    %v30 = vld [vmem:[%s1 + $0x1b8] sm:$0xff]
    %v31 = vld [vmem:[%s1 + $0x1e0] sm:$0xff]
    %v32 = vld [vmem:[%s1 + $0x208] sm:$0xff]
    %v33 = vld [vmem:[%s1 + $0x230] sm:$0xff]
    %v34 = vld [vmem:[%s1 + $0x258] sm:$0xff]
    %v35 = vld [vmem:[%s1 + $0x8] sm:$0xff]
    %v36 = vld [vmem:[%s1 + $0x30] sm:$0xff]
    %v37 = vld [vmem:[%s1 + $0x58] sm:$0xff]
    %v38 = vld [vmem:[%s1 + $0x80] sm:$0xff]
    %v39 = vld [vmem:[%s1 + $0xa8] sm:$0xff]
    %v40 = vld [vmem:[%s1 + $0xd0] sm:$0xff]
    %v41 = vld [vmem:[%s1 + $0xf8] sm:$0xff]
    %v42 = vld [vmem:[%s1 + $0x120] sm:$0xff]
    %v43 = vld [vmem:[%s1 + $0x148] sm:$0xff]
    %v44 = vld [vmem:[%s1 + $0x170] sm:$0xff]
    %v45 = vld [vmem:[%s1 + $0x198] sm:$0xff]
    %v46 = vld [vmem:[%s1 + $0x1c0] sm:$0xff]
    %v47 = vld [vmem:[%s1 + $0x1e8] sm:$0xff]
    %v48 = vld [vmem:[%s1 + $0x210] sm:$0xff]
    %v49 = vld [vmem:[%s1 + $0x238] sm:$0xff]
    %v50 = vld [vmem:[%s1 + $0x260] sm:$0xff]
    %v51 = vld [vmem:[%s1 + $0x10] sm:$0xff]
    %v52 = vld [vmem:[%s1 + $0x38] sm:$0xff]
    %v53 = vld [vmem:[%s1 + $0x60] sm:$0xff]
    %v54 = vld [vmem:[%s1 + $0x88] sm:$0xff]
    %v55 = vld [vmem:[%s1 + $0xb0] sm:$0xff]
    %v56 = vld [vmem:[%s1 + $0xd8] sm:$0xff]
    %v57 = vld [vmem:[%s1 + $0x100] sm:$0xff]
    %v58 = vld [vmem:[%s1 + $0x128] sm:$0xff]
    %v59 = vld [vmem:[%s1 + $0x150] sm:$0xff]
    %v60 = vld [vmem:[%s1 + $0x178] sm:$0xff]
    %v61 = vld [vmem:[%s1 + $0x1a0] sm:$0xff]
    %v62 = vld [vmem:[%s1 + $0x1c8] sm:$0xff]
    %v63 = vld [vmem:[%s1 + $0x1f0] sm:$0xff]
    %v64 = vld [vmem:[%s1 + $0x218] sm:$0xff]
    %v65 = vld [vmem:[%s1 + $0x240] sm:$0xff]
    %v66 = vld [vmem:[%s1 + $0x268] sm:$0xff]
    %v67 = vld [vmem:[%s1 + $0x18] sm:$0xff]
    %v68 = vld [vmem:[%s1 + $0x20] sm:$0xff]
    %v69 = vld [vmem:[%s1 + $0x40] sm:$0xff]
    %v70 = vld [vmem:[%s1 + $0x48] sm:$0xff]
    %v71 = vld [vmem:[%s1 + $0x68] sm:$0xff]
    %v72 = vld [vmem:[%s1 + $0x70] sm:$0xff]
    %v73 = vld [vmem:[%s1 + $0x90] sm:$0xff]
    %v74 = vld [vmem:[%s1 + $0x98] sm:$0xff]
    %v75 = vld [vmem:[%s1 + $0xb8] sm:$0xff]
    %v76 = vld [vmem:[%s1 + $0xc0] sm:$0xff]
    %v77 = vld [vmem:[%s1 + $0xe0] sm:$0xff]
    %v78 = vld [vmem:[%s1 + $0xe8] sm:$0xff]
    %v79 = vld [vmem:[%s1 + $0x108] sm:$0xff]
    %v80 = vld [vmem:[%s1 + $0x110] sm:$0xff]
    %v81 = vld [vmem:[%s1 + $0x130] sm:$0xff]
    %v82 = vld [vmem:[%s1 + $0x138] sm:$0xff]
    %v83 = vld [vmem:[%s1 + $0x158] sm:$0xff]
    %v84 = vld [vmem:[%s1 + $0x160] sm:$0xff]
    %v85 = vld [vmem:[%s1 + $0x180] sm:$0xff]
    %v86 = vld [vmem:[%s1 + $0x188] sm:$0xff]
    %v87 = vld [vmem:[%s1 + $0x1a8] sm:$0xff]
    %v88 = vld [vmem:[%s1 + $0x1b0] sm:$0xff]
    %v89 = vld [vmem:[%s1 + $0x1d0] sm:$0xff]
    %v90 = vld [vmem:[%s1 + $0x1d8] sm:$0xff]
    %v91 = vld [vmem:[%s1 + $0x1f8] sm:$0xff]
    %v92 = vld [vmem:[%s1 + $0x200] sm:$0xff]
    %v93 = vld [vmem:[%s1 + $0x220] sm:$0xff]
    %v94 = vld [vmem:[%s1 + $0x228] sm:$0xff]
    %v95 = vld [vmem:[%s1 + $0x248] sm:$0xff]
    %v96 = vld [vmem:[%s1 + $0x250] sm:$0xff]
    %v97 = vld [vmem:[%s1 + $0x270] sm:$0xff]
    %v98 = vld [vmem:[%s1 + $0x278] sm:$0xff]
    %v99 = vld [vmem:[%s2] sm:$0x1]
    %v100 = vld [vmem:[%s2 + $0x1] sm:$0x1]
    %v101 = vld [vmem:[%s2 + $0x2] sm:$0x1]
    %v102 = vld [vmem:[%s2 + $0x3] sm:$0x3]
    %v104 = vlaneseq
    %v105 = vshrl.u32 %v104, 7
    %v106 = vsub.s32 0, %v105
    %v107 = vrot.slane %v99, %v106
    %109 = vmatprep.subr.mxu0 0.0
    %110 = vmatpush1.msra.mxu0 %v19
    %111 = vmatprep.subr.mxu0 0.0
    %112 = vmatpush1.msra.mxu0 %v20
    %113 = vmatprep.subr.mxu0 0.0
    %114 = vmatpush1.msra.mxu0 %v21
    %115 = vmatprep.subr.mxu0 0.0
    %116 = vmatpush1.msra.mxu0 %v22
    %117 = vmatprep.subr.mxu0 0.0
    %118 = vmatpush1.msra.mxu0 %v23
    %119 = vmatprep.subr.mxu0 0.0
    %120 = vmatpush1.msra.mxu0 %v24
    %121 = vmatprep.subr.mxu0 0.0
    %122 = vmatpush1.msra.mxu0 %v25
    %123 = vmatprep.subr.mxu0 0.0
    %124 = vmatpush1.msra.mxu0 %v26
    %125 = vmatprep.subr.mxu0 0.0
    %126 = vmatpush1.msra.mxu0 %v27
    %127 = vmatprep.subr.mxu0 0.0
    %128 = vmatpush1.msra.mxu0 %v28
    %129 = vmatprep.subr.mxu0 0.0
    %130 = vmatpush1.msra.mxu0 %v29
    %131 = vmatprep.subr.mxu0 0.0
    %132 = vmatpush1.msra.mxu0 %v30
    %133 = vmatprep.subr.mxu0 0.0
    %134 = vmatpush1.msra.mxu0 %v31
    %135 = vmatprep.subr.mxu0 0.0
    %136 = vmatpush1.msra.mxu0 %v32
    %137 = vmatprep.subr.mxu0 0.0
    %138 = vmatpush1.msra.mxu0 %v33
    %139 = vmatprep.subr.mxu0 0.0
    %140 = vmatpush1.msra.mxu0 %v34
    %141 = vmatprep.subr.mxu0 0.0
    %142 = vmatpush1.msra.mxu0 0.0
    %143 = vmatprep.subr.mxu0 0.0
    %144 = vmatpush1.msra.mxu0 0.0
    %145 = vmatprep.subr.mxu0 0.0
    %146 = vmatpush1.msra.mxu0 0.0
    %147 = vmatprep.subr.mxu0 0.0
    %148 = vmatpush1.msra.mxu0 0.0
    %149 = vmatprep.subr.mxu0 0.0
    %150 = vmatpush1.msra.mxu0 0.0
    %151 = vmatprep.subr.mxu0 0.0
    %152 = vmatpush1.msra.mxu0 0.0
    %153 = vmatprep.subr.mxu0 0.0
    %154 = vmatpush1.msra.mxu0 0.0
    %155 = vmatprep.subr.mxu0 0.0
    %156 = vmatpush1.msra.mxu0 0.0
    %157 = vmatprep.subr.mxu0 0.0
    %158 = vmatpush1.msra.mxu0 0.0
    %159 = vmatprep.subr.mxu0 0.0
    %160 = vmatpush1.msra.mxu0 0.0
    %161 = vmatprep.subr.mxu0 0.0
    %162 = vmatpush1.msra.mxu0 0.0
    %163 = vmatprep.subr.mxu0 0.0
    %164 = vmatpush1.msra.mxu0 0.0
    %165 = vmatprep.subr.mxu0 0.0
    %166 = vmatpush1.msra.mxu0 0.0
    %167 = vmatprep.subr.mxu0 0.0
    %168 = vmatpush1.msra.mxu0 0.0
    %169 = vmatprep.subr.mxu0 0.0
    %170 = vmatpush1.msra.mxu0 0.0
    %171 = vmatprep.subr.mxu0 0.0
    %172 = vmatpush1.msra.mxu0 0.0
    %173 = vmatprep.mubr.f32.mxu0 0.0
    %174 = vmatmul.mubr.f32.gmra.mrb[0].mxu0 %v18
    %v175 = vpop.f32.mrb[0].mxu0
    %v176 = vadd.f32 %v107, %v175
    %v177 = vpop.f32.mrb[0].mxu0
    %178 = vdwg.mxu0
    %v179 = vmax.f32 %v176, 0.0
    %v181 = vlaneseq
    %v182 = vshrl.u32 %v181, 7
    %v183 = vsub.s32 0, %v182
    %v184 = vrot.slane %v100, %v183
    %186 = vmatprep.subr.mxu0 0.0
    %187 = vmatpush1.msra.mxu0 %v35
    %188 = vmatprep.subr.mxu0 0.0
    %189 = vmatpush1.msra.mxu0 %v36
    %190 = vmatprep.subr.mxu0 0.0
    %191 = vmatpush1.msra.mxu0 %v37
    %192 = vmatprep.subr.mxu0 0.0
    %193 = vmatpush1.msra.mxu0 %v38
    %194 = vmatprep.subr.mxu0 0.0
    %195 = vmatpush1.msra.mxu0 %v39
    %196 = vmatprep.subr.mxu0 0.0
    %197 = vmatpush1.msra.mxu0 %v40
    %198 = vmatprep.subr.mxu0 0.0
    %199 = vmatpush1.msra.mxu0 %v41
    %200 = vmatprep.subr.mxu0 0.0
    %201 = vmatpush1.msra.mxu0 %v42
    %202 = vmatprep.subr.mxu0 0.0
    %203 = vmatpush1.msra.mxu0 %v43
    %204 = vmatprep.subr.mxu0 0.0
    %205 = vmatpush1.msra.mxu0 %v44
    %206 = vmatprep.subr.mxu0 0.0
    %207 = vmatpush1.msra.mxu0 %v45
    %208 = vmatprep.subr.mxu0 0.0
    %209 = vmatpush1.msra.mxu0 %v46
    %210 = vmatprep.subr.mxu0 0.0
    %211 = vmatpush1.msra.mxu0 %v47
    %212 = vmatprep.subr.mxu0 0.0
    %213 = vmatpush1.msra.mxu0 %v48
    %214 = vmatprep.subr.mxu0 0.0
    %215 = vmatpush1.msra.mxu0 %v49
    %216 = vmatprep.subr.mxu0 0.0
    %217 = vmatpush1.msra.mxu0 %v50
    %218 = vmatprep.subr.mxu0 0.0
    %219 = vmatpush1.msra.mxu0 0.0
    %220 = vmatprep.subr.mxu0 0.0
    %221 = vmatpush1.msra.mxu0 0.0
    %222 = vmatprep.subr.mxu0 0.0
    %223 = vmatpush1.msra.mxu0 0.0
    %224 = vmatprep.subr.mxu0 0.0
    %225 = vmatpush1.msra.mxu0 0.0
    %226 = vmatprep.subr.mxu0 0.0
    %227 = vmatpush1.msra.mxu0 0.0
    %228 = vmatprep.subr.mxu0 0.0
    %229 = vmatpush1.msra.mxu0 0.0
    %230 = vmatprep.subr.mxu0 0.0
    %231 = vmatpush1.msra.mxu0 0.0
    %232 = vmatprep.subr.mxu0 0.0
    %233 = vmatpush1.msra.mxu0 0.0
    %234 = vmatprep.subr.mxu0 0.0
    %235 = vmatpush1.msra.mxu0 0.0
    %236 = vmatprep.subr.mxu0 0.0
    %237 = vmatpush1.msra.mxu0 0.0
    %238 = vmatprep.subr.mxu0 0.0
    %239 = vmatpush1.msra.mxu0 0.0
    %240 = vmatprep.subr.mxu0 0.0
    %241 = vmatpush1.msra.mxu0 0.0
    %242 = vmatprep.subr.mxu0 0.0
    %243 = vmatpush1.msra.mxu0 0.0
    %244 = vmatprep.subr.mxu0 0.0
    %245 = vmatpush1.msra.mxu0 0.0
    %246 = vmatprep.subr.mxu0 0.0
    %247 = vmatpush1.msra.mxu0 0.0
    %248 = vmatprep.subr.mxu0 0.0
    %249 = vmatpush1.msra.mxu0 0.0
    %250 = vmatprep.mubr.f32.mxu0 0.0
    %251 = vmatmul.mubr.f32.gmra.mrb[0].mxu0 %v179
    %v252 = vpop.f32.mrb[0].mxu0
    %v253 = vadd.f32 %v184, %v252
    %v254 = vpop.f32.mrb[0].mxu0
    %255 = vdwg.mxu0
    %v256 = vxor.u32 %v253, 2147483648
    %v257 = vmul.f32 %v256, 1.442695
    %v258 = vpow.pop %v257
    %v259 = vadd.f32 %v258, 1.0
    %v260 = vrcp.pop %v259
    %v261 = vmul.f32 1.0, %v260
    %v263 = vlaneseq
    %v264 = vshrl.u32 %v263, 7
    %v265 = vsub.s32 0, %v264
    %v266 = vrot.slane %v101, %v265
    %268 = vmatprep.subr.mxu0 0.0
    %269 = vmatpush1.msra.mxu0 %v51
    %270 = vmatprep.subr.mxu0 0.0
    %271 = vmatpush1.msra.mxu0 %v52
    %272 = vmatprep.subr.mxu0 0.0
    %273 = vmatpush1.msra.mxu0 %v53
    %274 = vmatprep.subr.mxu0 0.0
    %275 = vmatpush1.msra.mxu0 %v54
    %276 = vmatprep.subr.mxu0 0.0
    %277 = vmatpush1.msra.mxu0 %v55
    %278 = vmatprep.subr.mxu0 0.0
    %279 = vmatpush1.msra.mxu0 %v56
    %280 = vmatprep.subr.mxu0 0.0
    %281 = vmatpush1.msra.mxu0 %v57
    %282 = vmatprep.subr.mxu0 0.0
    %283 = vmatpush1.msra.mxu0 %v58
    %284 = vmatprep.subr.mxu0 0.0
    %285 = vmatpush1.msra.mxu0 %v59
    %286 = vmatprep.subr.mxu0 0.0
    %287 = vmatpush1.msra.mxu0 %v60
    %288 = vmatprep.subr.mxu0 0.0
    %289 = vmatpush1.msra.mxu0 %v61
    %290 = vmatprep.subr.mxu0 0.0
    %291 = vmatpush1.msra.mxu0 %v62
    %292 = vmatprep.subr.mxu0 0.0
    %293 = vmatpush1.msra.mxu0 %v63
    %294 = vmatprep.subr.mxu0 0.0
    %295 = vmatpush1.msra.mxu0 %v64
    %296 = vmatprep.subr.mxu0 0.0
    %297 = vmatpush1.msra.mxu0 %v65
    %298 = vmatprep.subr.mxu0 0.0
    %299 = vmatpush1.msra.mxu0 %v66
    %300 = vmatprep.subr.mxu0 0.0
    %301 = vmatpush1.msra.mxu0 0.0
    %302 = vmatprep.subr.mxu0 0.0
    %303 = vmatpush1.msra.mxu0 0.0
    %304 = vmatprep.subr.mxu0 0.0
    %305 = vmatpush1.msra.mxu0 0.0
    %306 = vmatprep.subr.mxu0 0.0
    %307 = vmatpush1.msra.mxu0 0.0
    %308 = vmatprep.subr.mxu0 0.0
    %309 = vmatpush1.msra.mxu0 0.0
    %310 = vmatprep.subr.mxu0 0.0
    %311 = vmatpush1.msra.mxu0 0.0
    %312 = vmatprep.subr.mxu0 0.0
    %313 = vmatpush1.msra.mxu0 0.0
    %314 = vmatprep.subr.mxu0 0.0
    %315 = vmatpush1.msra.mxu0 0.0
    %316 = vmatprep.subr.mxu0 0.0
    %317 = vmatpush1.msra.mxu0 0.0
    %318 = vmatprep.subr.mxu0 0.0
    %319 = vmatpush1.msra.mxu0 0.0
    %320 = vmatprep.subr.mxu0 0.0
    %321 = vmatpush1.msra.mxu0 0.0
    %322 = vmatprep.subr.mxu0 0.0
    %323 = vmatpush1.msra.mxu0 0.0
    %324 = vmatprep.subr.mxu0 0.0
    %325 = vmatpush1.msra.mxu0 0.0
    %326 = vmatprep.subr.mxu0 0.0
    %327 = vmatpush1.msra.mxu0 0.0
    %328 = vmatprep.subr.mxu0 0.0
    %329 = vmatpush1.msra.mxu0 0.0
    %330 = vmatprep.subr.mxu0 0.0
    %331 = vmatpush1.msra.mxu0 0.0
    %332 = vmatprep.mubr.f32.mxu0 0.0
    %333 = vmatmul.mubr.f32.gmra.mrb[0].mxu0 %v261
    %v334 = vpop.f32.mrb[0].mxu0
    %v335 = vadd.f32 %v266, %v334
    %v336 = vpop.f32.mrb[0].mxu0
    %337 = vdwg.mxu0
    %v338 = vmax.f32 %v335, 0.0
    %v340 = vlaneseq
    %v341 = vshrl.u32 %v340, 7
    %v342 = vsub.s32 0, %v341
    %v343 = vrot.slane %v102, %v342
    %v344 = vlaneseq
    %v345 = vshrl.u32 %v344, 7
    %v346 = vsub.s32 1, %v345
    %v347 = vrot.slane %v102, %v346
    %350 = vmatprep.subr.mxu0 %v68
    %351 = vmatpush1.msra.mxu0 %v67
    %352 = vmatprep.subr.mxu0 %v70
    %353 = vmatpush1.msra.mxu0 %v69
    %354 = vmatprep.subr.mxu0 %v72
    %355 = vmatpush1.msra.mxu0 %v71
    %356 = vmatprep.subr.mxu0 %v74
    %357 = vmatpush1.msra.mxu0 %v73
    %358 = vmatprep.subr.mxu0 %v76
    %359 = vmatpush1.msra.mxu0 %v75
    %360 = vmatprep.subr.mxu0 %v78
    %361 = vmatpush1.msra.mxu0 %v77
    %362 = vmatprep.subr.mxu0 %v80
    %363 = vmatpush1.msra.mxu0 %v79
    %364 = vmatprep.subr.mxu0 %v82
    %365 = vmatpush1.msra.mxu0 %v81
    %366 = vmatprep.subr.mxu0 %v84
    %367 = vmatpush1.msra.mxu0 %v83
    %368 = vmatprep.subr.mxu0 %v86
    %369 = vmatpush1.msra.mxu0 %v85
    %370 = vmatprep.subr.mxu0 %v88
    %371 = vmatpush1.msra.mxu0 %v87
    %372 = vmatprep.subr.mxu0 %v90
    %373 = vmatpush1.msra.mxu0 %v89
    %374 = vmatprep.subr.mxu0 %v92
    %375 = vmatpush1.msra.mxu0 %v91
    %376 = vmatprep.subr.mxu0 %v94
    %377 = vmatpush1.msra.mxu0 %v93
    %378 = vmatprep.subr.mxu0 %v96
    %379 = vmatpush1.msra.mxu0 %v95
    %380 = vmatprep.subr.mxu0 %v98
    %381 = vmatpush1.msra.mxu0 %v97
    %382 = vmatprep.subr.mxu0 0.0
    %383 = vmatpush1.msra.mxu0 0.0
    %384 = vmatprep.subr.mxu0 0.0
    %385 = vmatpush1.msra.mxu0 0.0
    %386 = vmatprep.subr.mxu0 0.0
    %387 = vmatpush1.msra.mxu0 0.0
    %388 = vmatprep.subr.mxu0 0.0
    %389 = vmatpush1.msra.mxu0 0.0
    %390 = vmatprep.subr.mxu0 0.0
    %391 = vmatpush1.msra.mxu0 0.0
    %392 = vmatprep.subr.mxu0 0.0
    %393 = vmatpush1.msra.mxu0 0.0
    %394 = vmatprep.subr.mxu0 0.0
    %395 = vmatpush1.msra.mxu0 0.0
    %396 = vmatprep.subr.mxu0 0.0
    %397 = vmatpush1.msra.mxu0 0.0
    %398 = vmatprep.subr.mxu0 0.0
    %399 = vmatpush1.msra.mxu0 0.0
    %400 = vmatprep.subr.mxu0 0.0
    %401 = vmatpush1.msra.mxu0 0.0
    %402 = vmatprep.subr.mxu0 0.0
    %403 = vmatpush1.msra.mxu0 0.0
    %404 = vmatprep.subr.mxu0 0.0
    %405 = vmatpush1.msra.mxu0 0.0
    %406 = vmatprep.subr.mxu0 0.0
    %407 = vmatpush1.msra.mxu0 0.0
    %408 = vmatprep.subr.mxu0 0.0
    %409 = vmatpush1.msra.mxu0 0.0
    %410 = vmatprep.subr.mxu0 0.0
    %411 = vmatpush1.msra.mxu0 0.0
    %412 = vmatprep.subr.mxu0 0.0
    %413 = vmatpush1.msra.mxu0 0.0
    %414 = vmatprep.mubr.f32.mxu0 0.0
    %415 = vmatmul.mubr.f32.gmra.mrb[0].mxu0 %v338
    %v416 = vpop.f32.mrb[0].mxu0
    %v417 = vadd.f32 %v343, %v416
    %v418 = vpop.f32.mrb[0].mxu0
    %v419 = vadd.f32 %v347, %v418
    %420 = vdwg.mxu0
    %v421 = vxor.u32 %v417, 2147483648
    %v422 = vxor.u32 %v419, 2147483648
    %v423 = vmul.f32 %v421, 1.442695
    %v424 = vpow.pop %v423
    %v425 = vmul.f32 %v422, 1.442695
    %v426 = vpow.pop %v425
    %v427 = vadd.f32 %v424, 1.0
    %v428 = vadd.f32 %v426, 1.0
    %v429 = vrcp.pop %v427
    %v430 = vmul.f32 1.0, %v429
    %v431 = vrcp.pop %v428
    %v432 = vmul.f32 1.0, %v431
    %434 = vrot.lane.b32.xlu0 %v261, 96
    %v435 = vpop.permute.xlu0 %434
    %v437 = vadd.f32 %v261, %v435
    %v438 = vmul.f32 %v437, 0.5
    %vm439 = vcmask 261120
    %v440 = vsel %vm439, %v438, 0.0
    %441 = vst [vmem:[#allocation2] sm:$0xff] %v440
    %v442 = vadd.f32 %v430, %v432
    %v443 = vmul.f32 %v442, 0.5
    %444 = vst [vmem:[#allocation4] sm:$0xff] %v443
    // Predicated region
    $region14: #{lateralized_hippocampus_forward.1} parent=1 // pred_check
      _
    $region15: #{lateralized_hippocampus_forward.1} parent=1 // pred_check_branch
      %446 = sbr.rel (0) target = $region17
    $region16: #{lateralized_hippocampus_forward.1} parent=1 // pred_region
      %s448 = ssub.s32 128, 128
      %449 = vsyncadd [#allocation3], %s448
      %s451 = sshll.u32 [#allocation2], 4
      %s452 = int_to_ptr.vmem [resolvable:$true] %s451
      %454 = dma.vmem_to_hbm [thread:$0]  %s452, 128, %s3, [#allocation3]
    $region17: #{lateralized_hippocampus_forward.1} parent=1 // pred_fallthru
      _
    // Predicated region
    $region18: #{lateralized_hippocampus_forward.1} parent=1 // pred_check
      _
    $region19: #{lateralized_hippocampus_forward.1} parent=1 // pred_check_branch
      %456 = sbr.rel (0) target = $region21
    $region20: #{lateralized_hippocampus_forward.1} parent=1 // pred_region
      %s458 = ssub.s32 128, 128
      %459 = vsyncadd [#allocation5], %s458
      %s461 = sshll.u32 [#allocation4], 4
      %s462 = int_to_ptr.vmem [resolvable:$true] %s461
      %464 = dma.vmem_to_hbm [thread:$0]  %s462, 128, %s4, [#allocation5]
    $region21: #{lateralized_hippocampus_forward.1} parent=1 // pred_fallthru
      _
    // Predicated region
    $region22: #{lateralized_hippocampus_forward.1} parent=1 // pred_check
      _
    $region23: #{lateralized_hippocampus_forward.1} parent=1 // pred_check_branch
      %466 = sbr.rel (0) target = $region25
    $region24: #{lateralized_hippocampus_forward.1} parent=1 // pred_region
      %467 = dma.done [#allocation3], 128
    $region25: #{lateralized_hippocampus_forward.1} parent=1 // pred_fallthru
      _
    // Predicated region
    $region26: #{lateralized_hippocampus_forward.1} parent=1 // pred_check
      _
    $region27: #{lateralized_hippocampus_forward.1} parent=1 // pred_check_branch
      %469 = sbr.rel (0) target = $region29
    $region28: #{lateralized_hippocampus_forward.1} parent=1 // pred_region
      %470 = dma.done [#allocation5], 128
    $region29: #{lateralized_hippocampus_forward.1} parent=1 // pred_fallthru
      _
    %471 = vsyncpa [#allocation3], 1
    %472 = vsyncpa [#allocation5], 1

</llo_original>
